<compile_context>
chip_gen: v7x
topology: tpu7x:2x2x1
jax: 0.10.0
libtpu: 0.0.40
codegen_flags: <defaults>
</compile_context>

<pallas_src>
import math

import jax
import jax.numpy as jnp
from jax.experimental import pallas as pl
from jax.experimental.pallas import tpu as pltpu


def _round_up(x, m):
    return ((x + m - 1) // m) * m


def _setconv_kernel(xg_ref, x_ref, zt_ref, out_ref):
    """One (batch, M-tile) grid cell.

    xg_ref : [1, dx, TM]  grid coords, pre-scaled by 1/lengthscale, transposed
    x_ref  : [1, N, dx]   off-grid (context) coords, pre-scaled by 1/lengthscale
    zt_ref : [1, dz, N]   off-grid values, transposed
    out_ref: [1, dz, TM]  output tile (lane-dense along the M-tile axis)
    """
    xg = xg_ref[0]                    # [dx, TM]
    x = x_ref[0]                      # [N, dx]
    dx = x.shape[1]

    # Pairwise squared distances in [N, TM] (lane-dense) layout, computed directly
    # on the VPU (dx is 1-3, statically unrolled): exact (a-b)^2, no K=dx MXU matmul.
    diff = xg[0:1, :] - x[:, 0:1]                   # [N, TM]
    d2 = diff * diff
    for k in range(1, dx):
        diff = xg[k:k + 1, :] - x[:, k:k + 1]       # [N, TM]
        d2 = d2 + diff * diff

    w = jnp.exp(-0.5 * d2)            # [N, TM], fully packed lanes for the EUP exp

    # out^T[dz, TM] = z^T[dz, N] @ w[N, TM]  (MXU, f32 accumulation)
    out_ref[0] = jnp.dot(zt_ref[0], w, preferred_element_type=jnp.float32)


def setconv_to_grid_pallas(x, z, x_grid, lengthscale, z_grid=None, tm_target=1024):
    """x: [B,N,dx]; z: [B,N,dz]; x_grid: [B,*grid,dx]; lengthscale: [1] or [dx]."""
    B, N, dx = x.shape
    dz = z.shape[-1]
    grid_dims = x_grid.shape[1:-1]
    M = 1
    for s in grid_dims:
        M *= s

    # M-tile size: multiple of 128 (lane-dense stores), bounded by the padded M.
    # Per-tile VMEM footprint at TM=1024 is a few hundred KiB for typical N/dz,
    # well inside scoped VMEM on v5e/v6e/v7x.
    # TODO(synk): for very large context sets N (>~2K), tile N with a third
    # ("arbitrary") grid axis and a VMEM f32 accumulator (pl.when init/finalize).
    m_pad = _round_up(M, 128)
    tm = min(_round_up(tm_target, 128), m_pad)
    m_pad = _round_up(M, tm)
    num_m = m_pad // tm

    inv_ls = 1.0 / jnp.broadcast_to(
        jnp.asarray(lengthscale, jnp.float32).reshape(-1), (dx,))

    # Pre-scale coordinates by 1/lengthscale; the scale fuses into the transpose/pad
    # copies XLA performs anyway, so the kernel needs no lengthscale operand.
    xg_flat = x_grid.reshape(B, M, dx).astype(jnp.float32)
    xg_t = jnp.swapaxes(xg_flat * inv_ls, 1, 2)                 # [B, dx, M]
    if m_pad != M:
        xg_t = jnp.pad(xg_t, ((0, 0), (0, 0), (0, m_pad - M)))  # pad M axis
    x_scaled = x.astype(jnp.float32) * inv_ls                   # [B, N, dx]
    z_t = jnp.swapaxes(z.astype(jnp.float32), 1, 2)             # [B, dz, N]

    out_t = pl.pallas_call(
        _setconv_kernel,
        out_shape=jax.ShapeDtypeStruct((B, dz, m_pad), jnp.float32),
        grid_spec=pltpu.PrefetchScalarGridSpec(
            num_scalar_prefetch=0,
            grid=(B, num_m),
            in_specs=[
                # streamed M-tiles of the (scaled, transposed) grid coordinates
                pl.BlockSpec((1, dx, tm), lambda b, m: (b, 0, m)),
                # context points / values: resident in VMEM across the m axis
                pl.BlockSpec((1, N, dx), lambda b, m: (b, 0, 0)),
                pl.BlockSpec((1, dz, N), lambda b, m: (b, 0, 0)),
            ],
            out_specs=pl.BlockSpec((1, dz, tm), lambda b, m: (b, 0, m)),
        ),
        compiler_params=pltpu.CompilerParams(
            dimension_semantics=("parallel", "parallel")),
    )(xg_t, x_scaled, z_t)

    zg = jnp.swapaxes(out_t, 1, 2)[:, :M, :]                    # [B, M, dz]
    if z_grid is not None:
        # Add fuses into the transpose-back copy; OFF_GRID never pays for this.
        zg = zg + z_grid.reshape(B, M, dz).astype(jnp.float32)
    return zg.reshape((B,) + grid_dims + (dz,))


class SetConvGridEncoder:
    """JAX/Pallas port of tnp.networks.grid_encoders.SetConvGridEncoder."""

    def __init__(self, *, ard_num_dims=None, init_lengthscale, grid_shape=None):
        self.ard_num_dims = ard_num_dims
        num_ls_dims = 1 if ard_num_dims is None else ard_num_dims
        init = jnp.asarray([init_lengthscale] * num_ls_dims, dtype=jnp.float32)
        # matches torch: param = log(exp(init) - 1)
        self.lengthscale_param = jnp.log(jnp.exp(init) - 1.0)
        self.grid_shape = grid_shape
        # TODO(synk): grid-coarsening path (grid_shape is not None / coarsen_fn)
        # not implemented here; coarsen_grid source is unavailable.

    @property
    def lengthscale(self):
        return 1e-5 + jax.nn.softplus(self.lengthscale_param)

    def __call__(self, xc_off_grid, xc_on_grid, zc_off_grid, zc_on_grid,
                 used_modality="both"):
        assert self.grid_shape is None, "coarsening path not implemented"
        assert used_modality != "on_grid", (
            "Without grid coarsening, an IdentityGridEncoder has to be used "
            "to ignore off-grid data.")
        x_grid = xc_on_grid
        z_grid = setconv_to_grid_pallas(
            x=xc_off_grid,
            z=zc_off_grid,
            x_grid=x_grid,
            lengthscale=self.lengthscale,
            z_grid=None if used_modality == "off_grid" else zc_on_grid,
        )
        return x_grid, z_grid


def _ref_setconv(x, z, x_grid, ls, z_grid):
    """Pure-JAX reference matching the PyTorch compute_eq_weights semantics."""
    B = x.shape[0]
    grid_dims = x_grid.shape[1:-1]
    xg = x_grid.reshape(B, -1, x.shape[-1])
    diff = (xg[:, :, None, :] - x[:, None, :, :]) / ls          # [B, M, N, dx]
    w = jnp.exp(-0.5 * jnp.sum(diff * diff, axis=-1))            # [B, M, N]
    zg = jnp.einsum("bmn,bnd->bmd", w, z)
    if z_grid is not None:
        zg = zg + z_grid.reshape(B, -1, z.shape[-1])
    return zg.reshape((B,) + grid_dims + (z.shape[-1],))


if __name__ == "__main__":
    key = jax.random.PRNGKey(0)
    B, N, H, W, dx, dz = 2, 8, 8, 8, 2, 16
    k1, k2, k3 = jax.random.split(key, 3)

    xc_off_grid = jax.random.uniform(k1, (B, N, dx), jnp.float32, -1.0, 1.0)
    g1 = jnp.linspace(-1.0, 1.0, H)
    g2 = jnp.linspace(-1.0, 1.0, W)
    grid = jnp.stack(jnp.meshgrid(g1, g2, indexing="ij"), axis=-1)  # [H, W, dx]
    xc_on_grid = jnp.broadcast_to(grid[None], (B, H, W, dx)).astype(jnp.float32)
    zc_off_grid = jax.random.normal(k2, (B, N, dz), jnp.float32)
    zc_on_grid = jax.random.normal(k3, (B, H, W, dz), jnp.float32)

    encoder = SetConvGridEncoder(ard_num_dims=dx, init_lengthscale=0.5)

    # "both" modality (adds the on-grid initial values)
    x_grid, z_grid = encoder(xc_off_grid, xc_on_grid, zc_off_grid, zc_on_grid,
                             used_modality="both")
    jax.block_until_ready(z_grid)
    assert x_grid.shape == (B, H, W, dx)
    assert z_grid.shape == (B, H, W, dz)
    z_ref = _ref_setconv(xc_off_grid, zc_off_grid, xc_on_grid,
                         encoder.lengthscale, zc_on_grid)
    assert jnp.allclose(z_grid, z_ref, rtol=1e-4, atol=1e-4), (
        "mismatch vs reference (both)")

    # "off_grid" modality (no z_grid add, no zeros materialized)
    _, z_grid_off = encoder(xc_off_grid, xc_on_grid, zc_off_grid, zc_on_grid,
                            used_modality="off_grid")
    jax.block_until_ready(z_grid_off)
    z_ref_off = _ref_setconv(xc_off_grid, zc_off_grid, xc_on_grid,
                             encoder.lengthscale, None)
    assert jnp.allclose(z_grid_off, z_ref_off, rtol=1e-4, atol=1e-4), (
        "mismatch vs reference (off_grid)")

    print("KERNEL_OK")
</pallas_src>

<mosaic_0001>
module attributes {stable_mosaic.version = 11 : i64} {
  func.func @_setconv_kernel(%arg0: i32, %arg1: i32, %arg2: memref<1x2x128xf32, #tpu.memory_space<vmem>>, %arg3: memref<1x8x2xf32, #tpu.memory_space<vmem>>, %arg4: memref<1x16x8xf32, #tpu.memory_space<vmem>>, %arg5: memref<1x16x128xf32, #tpu.memory_space<vmem>>) attributes {dimension_semantics = [#tpu.dimension_semantics<parallel>, #tpu.dimension_semantics<parallel>], iteration_bounds = array<i64: 2, 1>, scalar_prefetch = 0 : i64, scratch_operands = 0 : i64, tpu.core_type = #tpu.core_type<tc>, window_params = [{transform_indices = @transform_0, window_bounds = array<i64: 1, 2, 128>}, {transform_indices = @transform_1, window_bounds = array<i64: 1, 8, 2>}, {transform_indices = @transform_2, window_bounds = array<i64: 1, 16, 8>}, {transform_indices = @transform_3, window_bounds = array<i64: 1, 16, 128>}]} {
    %c0 = arith.constant 0 : index
    %c0_0 = arith.constant 0 : index
    %c0_1 = arith.constant 0 : index
    %0 = vector.load %arg2[%c0, %c0_0, %c0_1] : memref<1x2x128xf32, #tpu.memory_space<vmem>>, vector<1x2x128xf32>
    %1 = vector.shape_cast %0 : vector<1x2x128xf32> to vector<2x128xf32>
    %c0_2 = arith.constant 0 : index
    %c0_3 = arith.constant 0 : index
    %c0_4 = arith.constant 0 : index
    %2 = vector.load %arg3[%c0_2, %c0_3, %c0_4] : memref<1x8x2xf32, #tpu.memory_space<vmem>>, vector<1x8x2xf32>
    %3 = vector.shape_cast %2 : vector<1x8x2xf32> to vector<8x2xf32>
    %4 = vector.extract_strided_slice %1 {offsets = [0, 0], sizes = [1, 128], strides = [1, 1]} : vector<2x128xf32> to vector<1x128xf32>
    %5 = vector.extract_strided_slice %3 {offsets = [0, 0], sizes = [8, 1], strides = [1, 1]} : vector<8x2xf32> to vector<8x1xf32>
    %6 = vector.broadcast %4 : vector<1x128xf32> to vector<8x128xf32>
    %7 = vector.broadcast %5 : vector<8x1xf32> to vector<8x128xf32>
    %8 = arith.subf %6, %7 : vector<8x128xf32>
    %9 = arith.mulf %8, %8 : vector<8x128xf32>
    %10 = vector.extract_strided_slice %1 {offsets = [1, 0], sizes = [1, 128], strides = [1, 1]} : vector<2x128xf32> to vector<1x128xf32>
    %11 = vector.extract_strided_slice %3 {offsets = [0, 1], sizes = [8, 1], strides = [1, 1]} : vector<8x2xf32> to vector<8x1xf32>
    %12 = vector.broadcast %10 : vector<1x128xf32> to vector<8x128xf32>
    %13 = vector.broadcast %11 : vector<8x1xf32> to vector<8x128xf32>
    %14 = arith.subf %12, %13 : vector<8x128xf32>
    %15 = arith.mulf %14, %14 : vector<8x128xf32>
    %16 = arith.addf %9, %15 : vector<8x128xf32>
    %cst = arith.constant -5.000000e-01 : f32
    %17 = vector.broadcast %cst : f32 to vector<8x128xf32>
    %18 = arith.mulf %17, %16 : vector<8x128xf32>
    %19 = math.exp %18 : vector<8x128xf32>
    %c0_5 = arith.constant 0 : index
    %c0_6 = arith.constant 0 : index
    %c0_7 = arith.constant 0 : index
    %20 = vector.load %arg4[%c0_5, %c0_6, %c0_7] : memref<1x16x8xf32, #tpu.memory_space<vmem>>, vector<1x16x8xf32>
    %21 = vector.shape_cast %20 : vector<1x16x8xf32> to vector<16x8xf32>
    %cst_8 = arith.constant dense<0.000000e+00> : vector<16x128xf32>
    %22 = tpu.matmul %21, %19, %cst_8 {dimension_numbers = #tpu.dot_dimension_numbers<[1], [0], [0], [1], [0, 0, 1, 1], [], []>} : vector<16x8xf32>, vector<8x128xf32>, vector<16x128xf32> -> vector<16x128xf32>
    %c0_9 = arith.constant 0 : index
    %c0_10 = arith.constant 0 : index
    %c0_11 = arith.constant 0 : index
    %23 = vector.load %arg5[%c0_9, %c0_10, %c0_11] : memref<1x16x128xf32, #tpu.memory_space<vmem>>, vector<1x16x128xf32>
    %24 = vector.shape_cast %23 : vector<1x16x128xf32> to vector<16x128xf32>
    %25 = vector.shape_cast %22 : vector<16x128xf32> to vector<1x16x128xf32>
    tpu.vector_store %arg5[%c0_9, %c0_10, %c0_11], %25 {strides = array<i32>} : memref<1x16x128xf32, #tpu.memory_space<vmem>>, vector<1x16x128xf32>,
    return
  }
  func.func @transform_0(%arg0: i32, %arg1: i32) -> (i32, i32, i32) {
    %c0_i32 = arith.constant 0 : i32
    %c0_i32_0 = arith.constant 0 : i32
    return %arg0, %c0_i32, %arg1 : i32, i32, i32
  }
  func.func @transform_1(%arg0: i32, %arg1: i32) -> (i32, i32, i32) {
    %c0_i32 = arith.constant 0 : i32
    %c0_i32_0 = arith.constant 0 : i32
    %c0_i32_1 = arith.constant 0 : i32
    return %arg0, %c0_i32, %c0_i32_0 : i32, i32, i32
  }
  func.func @transform_2(%arg0: i32, %arg1: i32) -> (i32, i32, i32) {
    %c0_i32 = arith.constant 0 : i32
    %c0_i32_0 = arith.constant 0 : i32
    %c0_i32_1 = arith.constant 0 : i32
    return %arg0, %c0_i32, %c0_i32_0 : i32, i32, i32
  }
  func.func @transform_3(%arg0: i32, %arg1: i32) -> (i32, i32, i32) {
    %c0_i32 = arith.constant 0 : i32
    %c0_i32_0 = arith.constant 0 : i32
    return %arg0, %c0_i32, %arg1 : i32, i32, i32
  }
}

</mosaic_0001>

<llo_original>
// kernel: tpu_custom_call.1
$region0: #{tpu_custom_call.1}
  #allocation0 [shape = 'u32[]', space=smem, size = 0x4, offset = 0x4, fixed_abs, tag = 'smem constant byte address 0x4 - core index']
  #allocation1 [shape = 'u32[144,128]{1,0:T(1,128)}', space=vmem, size = 0x12000, scoped, tag = 'internal scratch']
  %s0 = inlined_call_operand.vmem [shape: f32[2,2,128], index: 0, kind: input, shape index: {}]
  %s1 = inlined_call_operand.vmem [shape: f32[2,8,2], index: 1, kind: input, shape index: {}]
  %s2 = inlined_call_operand.vmem [shape: f32[2,16,8], index: 2, kind: input, shape index: {}]
  %s3 = inlined_call_operand.hbm [shape: f32[2,16,128], index: 3, kind: output, shape index: {}]
  %s4 = sld [smem:[#allocation0]]
  $region45: #{tpu_custom_call.1} parent=0
    _
  %s6 = ssub.s32 1, %s4
  %s7 = scalar_select 0, %s6, %s4
  $region1: #{tpu_custom_call.1} parent=0
    #allocation2 [shape = 'u8[16384]{0}', space=vmem, size = 0x4000, scoped, tag = 'output window, operand 0']
    #allocation3 [shape = 's32[2]{0}', space=sflag, size = 0x8, scoped, tag = 'scoped memory for tpu_custom_call.1']
    %8 = vsyncpa [#allocation3], 0
    %s9 = scalar_lea.sflag [#allocation3], 1
    %10 = vsyncpa %s9, 0
    loop: start=0, step=1, limit=4
    $region2: #{tpu_custom_call.1} parent=1 // loop_pre_header
      _
    $region3: #{tpu_custom_call.1} parent=1 // loop_header
      %s12 = sphi 0, %s16
      %p13 = scmp.ge.s32.totalorder %s12, 4
      %s19 = sphi 0, %s31
      %s20 = sphi 0, %s27
      %s21 = sphi 0, %s19
      %s22 = sphi 0, %s20
      %s23 = sphi 0, %s21
      %s24 = sphi 0, %s22
      %s36 = sphi 0, %s38
      %s39 = sphi 0, %s36
      %s40 = sphi 0, %s39
      %s56 = sphi 0, %s40
      %s62 = sphi 0, %s64
      %s65 = sphi 0, %s62
      %s66 = sphi 0, %s65
      %s82 = sphi 0, %s66
      %s88 = sphi 0, %s90
      %s91 = sphi 0, %s88
      %s92 = sphi 0, %s91
      %s108 = sphi 0, %s92
      %s116 = sphi 0, %s118
      %s119 = sphi 0, %s116
      %s120 = sphi 0, %s119
      %s136 = sphi 0, %s120
    $region4: #{tpu_custom_call.1} parent=1 // loop_header_branch
      %15 = sbr.rel (%p13) target = $region8
    $region5: #{tpu_custom_call.1} parent=1 // loop_body
      %s17 = ssub.s32 %s12, 1
      %s18 = ssub.s32 %s12, 2
      %s25 = sadd.s32 1, %s20
      %p26 = scmp.ge.s32.totalorder %s25, 1
      %s27 = scalar_select %p26, 0, %s25
      %s28 = sadd.s32 1, %s19
      %s29 = scalar_select %p26, %s28, %s19
      %p30 = scmp.ge.s32.totalorder %s29, 2
      %s31 = scalar_select %p30, 0, %s29
      %s32 = ssub.s32 %s19, %s31
      %s33 = ssub.s32 %s20, %s27
      %s34 = sor.u32 %s32, %s33
      %p35 = scmp.eq.s32.totalorder %s34, 0
      %s37 = sadd.s32 %s36, 1
      %s38 = scalar_select %p35, %s36, %s37
      %p41 = pneg %p35
      %p42 = scmp.eq.s32.totalorder %s12, 1
      %p43 = por %p41, %p42
      %p44 = scmp.ne.s32.totalorder %s36, %s39
      %p45 = scmp.eq.s32.totalorder %s12, 0
      %p46 = por %p44, %p45
      %p47 = scmp.ne.s32.totalorder %s36, %s39
      %p48 = scmp.eq.s32.totalorder %s17, 1
      %p49 = por %p47, %p48
      %p50 = scmp.ne.s32.totalorder %s39, %s40
      %p51 = scmp.eq.s32.totalorder %s17, 0
      %p52 = por %p50, %p51
      %p53 = scmp.ne.s32.totalorder %s39, %s40
      %p54 = scmp.eq.s32.totalorder %s18, 1
      %p55 = por %p53, %p54
      %p57 = scmp.ne.s32.totalorder %s40, %s56
      %p58 = scmp.eq.s32.totalorder %s18, 0
      %p59 = por %p57, %p58
      %s60 = ssub.s32 %s19, %s31
      %p61 = scmp.eq.s32.totalorder %s60, 0
      %s63 = sadd.s32 %s62, 1
      %s64 = scalar_select %p61, %s62, %s63
      %p67 = pneg %p61
      %p68 = scmp.eq.s32.totalorder %s12, 1
      %p69 = por %p67, %p68
      %p70 = scmp.ne.s32.totalorder %s62, %s65
      %p71 = scmp.eq.s32.totalorder %s12, 0
      %p72 = por %p70, %p71
      %p73 = scmp.ne.s32.totalorder %s62, %s65
      %p74 = scmp.eq.s32.totalorder %s17, 1
      %p75 = por %p73, %p74
      %p76 = scmp.ne.s32.totalorder %s65, %s66
      %p77 = scmp.eq.s32.totalorder %s17, 0
      %p78 = por %p76, %p77
      %p79 = scmp.ne.s32.totalorder %s65, %s66
      %p80 = scmp.eq.s32.totalorder %s18, 1
      %p81 = por %p79, %p80
      %p83 = scmp.ne.s32.totalorder %s66, %s82
      %p84 = scmp.eq.s32.totalorder %s18, 0
      %p85 = por %p83, %p84
      %s86 = ssub.s32 %s19, %s31
      %p87 = scmp.eq.s32.totalorder %s86, 0
      %s89 = sadd.s32 %s88, 1
      %s90 = scalar_select %p87, %s88, %s89
      %p93 = pneg %p87
      %p94 = scmp.eq.s32.totalorder %s12, 1
      %p95 = por %p93, %p94
      %p96 = scmp.ne.s32.totalorder %s88, %s91
      %p97 = scmp.eq.s32.totalorder %s12, 0
      %p98 = por %p96, %p97
      %p99 = scmp.ne.s32.totalorder %s88, %s91
      %p100 = scmp.eq.s32.totalorder %s17, 1
      %p101 = por %p99, %p100
      %p102 = scmp.ne.s32.totalorder %s91, %s92
      %p103 = scmp.eq.s32.totalorder %s17, 0
      %p104 = por %p102, %p103
      %p105 = scmp.ne.s32.totalorder %s91, %s92
      %p106 = scmp.eq.s32.totalorder %s18, 1
      %p107 = por %p105, %p106
      %p109 = scmp.ne.s32.totalorder %s92, %s108
      %p110 = scmp.eq.s32.totalorder %s18, 0
      %p111 = por %p109, %p110
      %s112 = ssub.s32 %s19, %s31
      %s113 = ssub.s32 %s20, %s27
      %s114 = sor.u32 %s112, %s113
      %p115 = scmp.eq.s32.totalorder %s114, 0
      %s117 = sadd.s32 %s116, 1
      %s118 = scalar_select %p115, %s116, %s117
      %p121 = pneg %p115
      %p122 = scmp.eq.s32.totalorder %s12, 1
      %p123 = por %p121, %p122
      %p124 = scmp.ne.s32.totalorder %s116, %s119
      %p125 = scmp.eq.s32.totalorder %s12, 0
      %p126 = por %p124, %p125
      %p127 = scmp.ne.s32.totalorder %s116, %s119
      %p128 = scmp.eq.s32.totalorder %s17, 1
      %p129 = por %p127, %p128
      %p130 = scmp.ne.s32.totalorder %s119, %s120
      %p131 = scmp.eq.s32.totalorder %s17, 0
      %p132 = por %p130, %p131
      %p133 = scmp.ne.s32.totalorder %s119, %s120
      %p134 = scmp.eq.s32.totalorder %s18, 1
      %p135 = por %p133, %p134
      %p137 = scmp.ne.s32.totalorder %s120, %s136
      %p138 = scmp.eq.s32.totalorder %s18, 0
      %p139 = por %p137, %p138
      %p140 = scmp.le.s32.totalorder 1, %s12
      %p141 = scmp.lt.s32.totalorder %s12, 3
      %p142 = pnand %p140, %p141
      %p143 = pneg %p142
      // Predicated region
      $region9: #{tpu_custom_call.1} parent=5 // pred_check
        _
      $region10: #{tpu_custom_call.1} parent=5 // pred_check_branch
        %145 = sbr.rel (%p142) target = $region12
      $region11: #{tpu_custom_call.1} parent=5 // pred_region
        %s146 = ssub.s32 %s12, 1
      $region12: #{tpu_custom_call.1} parent=5 // pred_fallthru
        _
      %p147 = scmp.lt.s32.totalorder %s12, 2
      // Predicated region
      $region13: #{tpu_custom_call.1} parent=5 // pred_check
        %p148 = pneg %p147
      $region14: #{tpu_custom_call.1} parent=5 // pred_check_branch
        %150 = sbr.rel (%p148) target = $region16
      $region15: #{tpu_custom_call.1} parent=5 // pred_region
        // Predicated region
        $region17: #{tpu_custom_call.1} parent=15 // pred_check
          %p151 = pneg %p46
        $region18: #{tpu_custom_call.1} parent=15 // pred_check_branch
          %153 = sbr.rel (%p151) target = $region20
        $region19: #{tpu_custom_call.1} parent=15 // pred_region
          %p154 = scmp.lt.s32.totalorder %s19, 1
          %s155 = scalar_select %p154, %s19, 1
          %p156 = scmp.lt.s32.totalorder %s20, 0
          %s157 = scalar_select %p156, %s20, 0
          %s158 = sadd.s32 %s157, %s155
          %s159 = smul.addr %s158, 2
          %s160 = scalar_lea.vmem %s0, %s159
        $region20: #{tpu_custom_call.1} parent=15 // pred_fallthru
          _
        // Predicated region
        $region21: #{tpu_custom_call.1} parent=15 // pred_check
          %p161 = pneg %p72
        $region22: #{tpu_custom_call.1} parent=15 // pred_check_branch
          %163 = sbr.rel (%p161) target = $region24
        $region23: #{tpu_custom_call.1} parent=15 // pred_region
          %p164 = scmp.lt.s32.totalorder %s19, 1
          %s165 = scalar_select %p164, %s19, 1
          %s166 = smul.addr %s165, 8
          %s167 = scalar_lea.vmem %s1, %s166
        $region24: #{tpu_custom_call.1} parent=15 // pred_fallthru
          _
        // Predicated region
        $region25: #{tpu_custom_call.1} parent=15 // pred_check
          %p168 = pneg %p98
        $region26: #{tpu_custom_call.1} parent=15 // pred_check_branch
          %170 = sbr.rel (%p168) target = $region28
        $region27: #{tpu_custom_call.1} parent=15 // pred_region
          %p171 = scmp.lt.s32.totalorder %s19, 1
          %s172 = scalar_select %p171, %s19, 1
          %s173 = smul.addr %s172, 2
          %s174 = smul.addr %s173, 8
          %s175 = scalar_lea.vmem %s2, %s174
        $region28: #{tpu_custom_call.1} parent=15 // pred_fallthru
          _
      $region16: #{tpu_custom_call.1} parent=5 // pred_fallthru
        _
      %p176 = scmp.le.s32.totalorder 1, %s12
      %p177 = scmp.lt.s32.totalorder %s12, 3
      %p178 = pnand %p176, %p177
      %p179 = pneg %p178
      // Predicated region
      $region29: #{tpu_custom_call.1} parent=5 // pred_check
        _
      $region30: #{tpu_custom_call.1} parent=5 // pred_check_branch
        %181 = sbr.rel (%p178) target = $region32
      $region31: #{tpu_custom_call.1} parent=5 // pred_region
        %s182 = ssub.s32 %s12, 1
        %p183 = scmp.lt.s32.totalorder %s21, 1
        %s184 = scalar_select %p183, %s21, 1
        %p185 = scmp.lt.s32.totalorder %s22, 0
        %s186 = scalar_select %p185, %s22, 0
        %s187 = sadd.s32 %s186, %s184
        %s188 = smul.addr %s187, 2
        %s189 = scalar_lea.vmem %s0, %s188
        %p190 = pneg %p52
        %p191 = pneg %p49
        %p192 = scmp.lt.s32.totalorder %s21, 1
        %s193 = scalar_select %p192, %s21, 1
        %s194 = smul.addr %s193, 8
        %s195 = scalar_lea.vmem %s1, %s194
        %p196 = pneg %p78
        %p197 = pneg %p75
        %p198 = scmp.lt.s32.totalorder %s21, 1
        %s199 = scalar_select %p198, %s21, 1
        %s200 = smul.addr %s199, 2
        %s201 = smul.addr %s200, 8
        %s202 = scalar_lea.vmem %s2, %s201
        %p203 = pneg %p104
        %p204 = pneg %p101
        %p205 = pneg %p132
        %p206 = pneg %p129
        %s207 = sand.u32 %s119, 1
        %s208 = scalar_lea.sflag [#allocation3], %s207
        %s209 = sand.u32 %s119, 1
        %s210 = smul.addr %s209, 16
        %s211 = scalar_lea.vmem [#allocation2], %s210
        %p212 = scmp.lt.s32.totalorder %s21, 1
        %s213 = scalar_select %p212, %s21, 1
        %p214 = scmp.lt.s32.totalorder %s22, 0
        %s215 = scalar_select %p214, %s22, 0
        %s216 = sadd.s32 %s215, %s213
        %s217 = smul.addr %s216, 2
        %s218 = scalar_lea.vmem %s0, %s217
        %p219 = scmp.lt.s32.totalorder %s21, 1
        %s220 = scalar_select %p219, %s21, 1
        %s221 = smul.addr %s220, 8
        %s222 = scalar_lea.vmem %s1, %s221
        %p223 = scmp.lt.s32.totalorder %s21, 1
        %s224 = scalar_select %p223, %s21, 1
        %s225 = smul.addr %s224, 2
        %s226 = smul.addr %s225, 8
        %s227 = scalar_lea.vmem %s2, %s226
        %v228 = vld [vmem:[%s218] sm:$0x3]
        %v229 = vld [vmem:[%s222] sm:$0xff]
        %v230 = vlaneseq
        %v231 = vshrl.u32 %v230, 7
        %v232 = vsub.s32 0, %v231
        %v233 = vrot.slane %v228, %v232
        %235 = vset.pattern.permute.xlu0 0
        %236 = vperm.xlu0 %235, %v229
        %v237 = vpop.permute.xlu0 %236
        %v239 = vsub.f32 %v233, %v237
        %v240 = vmul.f32 %v239, %v239
        %v241 = vlaneseq
        %v242 = vshrl.u32 %v241, 7
        %v243 = vsub.s32 1, %v242
        %v244 = vrot.slane %v228, %v243
        %245 = vset.pattern.permute.xlu0 1
        %246 = vperm.xlu0 %245, %v229
        %v247 = vpop.permute.xlu0 %246
        %v249 = vsub.f32 %v244, %v247
        %v250 = vmul.f32 %v249, %v249
        %v251 = vadd.f32 %v240, %v250
        %v252 = vmul.f32 %v251, -0.5
        %v253 = vmul.f32 %v252, 1.442695
        %v254 = vpow.pop %v253
        %v255 = vld [vmem:[%s227] sm:$0xff]
        %v256 = vld [vmem:[%s227 + $0x8] sm:$0xff]
        %vm257 = vcmask 64512
        %v259 = vsel %vm257, %v255, 0
        %v262 = vsel %vm257, %v256, 0
        %264 = vmatprep.subr.mxu0 0.0
        %265 = vmatpush1.msra.mxu0 %v254
        %266 = vmatprep.subr.mxu0 0.0
        %267 = vmatpush1.msra.mxu0 0.0
        %268 = vmatprep.subr.mxu0 0.0
        %269 = vmatpush1.msra.mxu0 0.0
        %270 = vmatprep.subr.mxu0 0.0
        %271 = vmatpush1.msra.mxu0 0.0
        %272 = vmatprep.subr.mxu0 0.0
        %273 = vmatpush1.msra.mxu0 0.0
        %274 = vmatprep.subr.mxu0 0.0
        %275 = vmatpush1.msra.mxu0 0.0
        %276 = vmatprep.subr.mxu0 0.0
        %277 = vmatpush1.msra.mxu0 0.0
        %278 = vmatprep.subr.mxu0 0.0
        %279 = vmatpush1.msra.mxu0 0.0
        %280 = vmatprep.subr.mxu0 0.0
        %281 = vmatpush1.msra.mxu0 0.0
        %282 = vmatprep.subr.mxu0 0.0
        %283 = vmatpush1.msra.mxu0 0.0
        %284 = vmatprep.subr.mxu0 0.0
        %285 = vmatpush1.msra.mxu0 0.0
        %286 = vmatprep.subr.mxu0 0.0
        %287 = vmatpush1.msra.mxu0 0.0
        %288 = vmatprep.subr.mxu0 0.0
        %289 = vmatpush1.msra.mxu0 0.0
        %290 = vmatprep.subr.mxu0 0.0
        %291 = vmatpush1.msra.mxu0 0.0
        %292 = vmatprep.subr.mxu0 0.0
        %293 = vmatpush1.msra.mxu0 0.0
        %294 = vmatprep.subr.mxu0 0.0
        %295 = vmatpush1.msra.mxu0 0.0
        %296 = vmatprep.subr.mxu0 0.0
        %297 = vmatpush1.msra.mxu0 0.0
        %298 = vmatprep.subr.mxu0 0.0
        %299 = vmatpush1.msra.mxu0 0.0
        %300 = vmatprep.subr.mxu0 0.0
        %301 = vmatpush1.msra.mxu0 0.0
        %302 = vmatprep.subr.mxu0 0.0
        %303 = vmatpush1.msra.mxu0 0.0
        %304 = vmatprep.subr.mxu0 0.0
        %305 = vmatpush1.msra.mxu0 0.0
        %306 = vmatprep.subr.mxu0 0.0
        %307 = vmatpush1.msra.mxu0 0.0
        %308 = vmatprep.subr.mxu0 0.0
        %309 = vmatpush1.msra.mxu0 0.0
        %310 = vmatprep.subr.mxu0 0.0
        %311 = vmatpush1.msra.mxu0 0.0
        %312 = vmatprep.subr.mxu0 0.0
        %313 = vmatpush1.msra.mxu0 0.0
        %314 = vmatprep.subr.mxu0 0.0
        %315 = vmatpush1.msra.mxu0 0.0
        %316 = vmatprep.subr.mxu0 0.0
        %317 = vmatpush1.msra.mxu0 0.0
        %318 = vmatprep.subr.mxu0 0.0
        %319 = vmatpush1.msra.mxu0 0.0
        %320 = vmatprep.subr.mxu0 0.0
        %321 = vmatpush1.msra.mxu0 0.0
        %322 = vmatprep.subr.mxu0 0.0
        %323 = vmatpush1.msra.mxu0 0.0
        %324 = vmatprep.subr.mxu0 0.0
        %325 = vmatpush1.msra.mxu0 0.0
        %326 = vmatprep.subr.mxu0 0.0
        %327 = vmatpush1.msra.mxu0 0.0
        %328 = vmatprep.mubr.f32.mxu0 0.0
        %329 = vmatmul.mubr.f32.gmra.mrb[0].mxu0 %v259
        %v330 = vpop.f32.mrb[0].mxu0
        %v331 = vadd.f32 0.0, %v330
        %v332 = vpop.f32.mrb[0].mxu0
        %333 = vmatprep.mubr.f32.mxu0 0.0
        %334 = vmatmul.mubr.f32.gmra.mrb[0].mxu0 %v262
        %v335 = vpop.f32.mrb[0].mxu0
        %v336 = vadd.f32 0.0, %v335
        %v337 = vpop.f32.mrb[0].mxu0
        %338 = vdwg.mxu0
        %339 = vst [vmem:[%s211] sm:$0xff] %v331
        %340 = vst [vmem:[%s211 + $0x8] sm:$0xff] %v336
        %s341 = sand.u32 %s119, 1
        %s342 = scalar_lea.sflag [#allocation3], %s341
        %s343 = sand.u32 %s119, 1
        %s344 = smul.addr %s343, 16
        %s345 = scalar_lea.vmem [#allocation2], %s344
        // Predicated region
        $region33: #{tpu_custom_call.1} parent=31 // pred_check
          %p346 = pneg %p129
        $region34: #{tpu_custom_call.1} parent=31 // pred_check_branch
          %348 = sbr.rel (%p346) target = $region36
        $region35: #{tpu_custom_call.1} parent=31 // pred_region
          %s350 = ssub.s32 256, 256
          %351 = vsyncadd %s342, %s350
          %s352 = smul.addr %s21, 2
          %s353 = sadd.s32 %s22, %s352
          %s354 = smul.addr %s353, 128
          %s355 = scalar_lea.hbm %s3, %s354
          %s356 = sshll.u32 %s345, 4
          %s357 = int_to_ptr.vmem [resolvable:$true] %s356
          %362 = dma.vmem_to_hbm [thread:$0]  %s357, 256, %s355, %s342, 128, 128, 8
        $region36: #{tpu_custom_call.1} parent=31 // pred_fallthru
          _
      $region32: #{tpu_custom_call.1} parent=5 // pred_fallthru
        _
      %p363 = scmp.le.s32.totalorder 2, %s12
      // Predicated region
      $region37: #{tpu_custom_call.1} parent=5 // pred_check
        %p364 = pneg %p363
      $region38: #{tpu_custom_call.1} parent=5 // pred_check_branch
        %366 = sbr.rel (%p364) target = $region40
      $region39: #{tpu_custom_call.1} parent=5 // pred_region
        %s367 = ssub.s32 %s12, 2
        // Predicated region
        $region41: #{tpu_custom_call.1} parent=39 // pred_check
          %p368 = pneg %p135
        $region42: #{tpu_custom_call.1} parent=39 // pred_check_branch
          %370 = sbr.rel (%p368) target = $region44
        $region43: #{tpu_custom_call.1} parent=39 // pred_region
          %s371 = sand.u32 %s120, 1
          %s372 = scalar_lea.sflag [#allocation3], %s371
          %s373 = sand.u32 %s120, 1
          %s374 = smul.addr %s373, 16
          %s375 = scalar_lea.vmem [#allocation2], %s374
          %376 = dma.done %s372, 256
        $region44: #{tpu_custom_call.1} parent=39 // pred_fallthru
          _
      $region40: #{tpu_custom_call.1} parent=5 // pred_fallthru
        _
    $region6: #{tpu_custom_call.1} parent=1 // loop_footer
      %s16 = sadd.s32 1, %s12
    $region7: #{tpu_custom_call.1} parent=1 // loop_footer_branch
      %11 = sbr.rel target = $region3
    $region8: #{tpu_custom_call.1} parent=1 // loop_exit
      _
    %377 = vsyncpa [#allocation3], 1
    %s378 = scalar_lea.sflag [#allocation3], 1
    %379 = vsyncpa %s378, 1

</llo_original>
